<compile_context>
chip_gen: v7x
topology: tpu7x:2x2x1
jax: 0.10.0
libtpu: 0.0.40
codegen_flags: <defaults>
</compile_context>

<pallas_src>
import jax
import jax.numpy as jnp
from jax.experimental import pallas as pl
from jax.experimental.pallas import tpu as pltpu


def _identity_kernel(x_ref, o_ref):
    # Elementwise pass-through of the current VMEM tile.
    o_ref[...] = x_ref[...]


def _round_up(a: int, b: int) -> int:
    return ((a + b - 1) // b) * b


def base_network_forward(x: jnp.ndarray) -> jnp.ndarray:
    """Pallas 'forward' for BaseNetwork: identity over an arbitrary-shape tensor."""
    orig_shape = x.shape
    dtype = x.dtype
    itemsize = jnp.dtype(dtype).itemsize
    # Packed sublane multiple: 8 for f32/i32, 16 for bf16, 32 for int8.
    sublane = max(8, 32 // itemsize)

    flat = x.reshape(-1)
    total = flat.shape[0]

    # Lane-dense last dim: widest candidate that divides the element count
    # (no padding); otherwise pad up to 512 lanes.
    lane = 512
    for cand in (1024, 512, 256, 128):
        if total % cand == 0:
            lane = cand
            break

    rows = pl.cdiv(total, lane)

    # Tile footprint cap: ~4 MiB per buffer.  With in + out double-buffered
    # that is <= ~16 MiB of VMEM (fits the 32 MiB scoped limit everywhere).
    target_tile_bytes = 4 * 1024 * 1024
    tile_rows_cap = max(
        sublane, (target_tile_bytes // (lane * itemsize)) // sublane * sublane
    )

    if rows <= tile_rows_cap:
        # Small input: a single block over the full row extent.
        tile_rows = rows
        rows_padded = rows
    else:
        tile_rows = tile_rows_cap
        rows_padded = _round_up(rows, tile_rows)

    padded_total = rows_padded * lane
    if padded_total != total:
        flat = jnp.pad(flat, (0, padded_total - total))
    x2d = flat.reshape(rows_padded, lane)

    num_blocks = rows_padded // tile_rows

    out2d = pl.pallas_call(
        _identity_kernel,
        out_shape=jax.ShapeDtypeStruct((rows_padded, lane), dtype),
        grid_spec=pltpu.PrefetchScalarGridSpec(
            num_scalar_prefetch=0,
            grid=(num_blocks,),
            in_specs=[pl.BlockSpec((tile_rows, lane), lambda i: (i, 0))],
            out_specs=pl.BlockSpec((tile_rows, lane), lambda i: (i, 0)),
        ),
        compiler_params=pltpu.CompilerParams(
            dimension_semantics=("parallel",),
            vmem_limit_bytes=32 * 1024 * 1024,
        ),
    )(x2d)

    out_flat = out2d.reshape(-1)
    if padded_total != total:
        out_flat = out_flat[:total]
    return out_flat.reshape(orig_shape)


if __name__ == "__main__":
    key = jax.random.PRNGKey(0)
    # Small NCHW input consistent with a typical subclass forward.
    x = jax.random.normal(key, (2, 4, 16, 16), dtype=jnp.float32)

    y = base_network_forward(x)
    jax.block_until_ready(y)

    # Sanity check: identity semantics (shape, dtype, values preserved).
    assert y.shape == x.shape and y.dtype == x.dtype
    assert bool(jnp.allclose(y, x))

    print("KERNEL_OK")
</pallas_src>

<mosaic_0001>
module attributes {stable_mosaic.version = 11 : i64} {
  func.func @_identity_kernel(%arg0: i32, %arg1: memref<2x1024xf32, #tpu.memory_space<vmem>>, %arg2: memref<2x1024xf32, #tpu.memory_space<vmem>>) attributes {dimension_semantics = [#tpu.dimension_semantics<parallel>], iteration_bounds = array<i64: 1>, scalar_prefetch = 0 : i64, scratch_operands = 0 : i64, tpu.core_type = #tpu.core_type<tc>, window_params = [{transform_indices = @transform_0, window_bounds = array<i64: 2, 1024>}, {transform_indices = @transform_1, window_bounds = array<i64: 2, 1024>}]} {
    %c0 = arith.constant 0 : index
    %c0_0 = arith.constant 0 : index
    %0 = vector.load %arg1[%c0, %c0_0] : memref<2x1024xf32, #tpu.memory_space<vmem>>, vector<2x1024xf32>
    %c0_1 = arith.constant 0 : index
    %c0_2 = arith.constant 0 : index
    %1 = vector.load %arg2[%c0_1, %c0_2] : memref<2x1024xf32, #tpu.memory_space<vmem>>, vector<2x1024xf32>
    tpu.vector_store %arg2[%c0_1, %c0_2], %0 {strides = array<i32>} : memref<2x1024xf32, #tpu.memory_space<vmem>>, vector<2x1024xf32>,
    return
  }
  func.func @transform_0(%arg0: i32) -> (i32, i32) {
    %c0_i32 = arith.constant 0 : i32
    %c0_i32_0 = arith.constant 0 : i32
    return %arg0, %c0_i32 : i32, i32
  }
  func.func @transform_1(%arg0: i32) -> (i32, i32) {
    %c0_i32 = arith.constant 0 : i32
    %c0_i32_0 = arith.constant 0 : i32
    return %arg0, %c0_i32 : i32, i32
  }
}

</mosaic_0001>

<llo_original>
// kernel: tpu_custom_call.1
$region0: #{tpu_custom_call.1}
  #allocation0 [shape = 'u32[]', space=smem, size = 0x4, offset = 0x4, fixed_abs, tag = 'smem constant byte address 0x4 - core index']
  #allocation1 [shape = 'u32[144,128]{1,0:T(1,128)}', space=vmem, size = 0x12000, scoped, tag = 'internal scratch']
  %s0 = inlined_call_operand.hbm [shape: f32[2,1024], index: 0, kind: input, shape index: {}]
  %s1 = inlined_call_operand.hbm [shape: f32[2,1024], index: 1, kind: output, shape index: {}]
  %s2 = sld [smem:[#allocation0]]
  $region18: #{tpu_custom_call.1} parent=0
    _
  %s4 = ssub.s32 1, %s2
  %s5 = scalar_select 0, %s4, %s2
  $region1: #{tpu_custom_call.1} parent=0
    #allocation2 [shape = 'u8[8192]{0}', space=vmem, size = 0x2000, scoped, tag = 'input window, operand 0, single buffered']
    #allocation3 [shape = 's32[1]{0}', space=sflag, size = 0x4, scoped, tag = 'scoped memory for tpu_custom_call.1']
    #allocation4 [shape = 's32[1]{0}', space=sflag, size = 0x4, scoped, tag = 'scoped memory for tpu_custom_call.1']
    #allocation5 [shape = 'u8[8192]{0}', space=vmem, size = 0x2000, scoped, tag = 'output window, operand 0, single buffered']
    %6 = vsyncpa [#allocation3], 0
    %7 = vsyncpa [#allocation4], 0
    // Predicated region
    $region2: #{tpu_custom_call.1} parent=1 // pred_check
      _
    $region3: #{tpu_custom_call.1} parent=1 // pred_check_branch
      %9 = sbr.rel (0) target = $region5
    $region4: #{tpu_custom_call.1} parent=1 // pred_region
      %s11 = ssub.s32 256, 256
      %12 = vsyncadd [#allocation3], %s11
      %s14 = sshll.u32 [#allocation2], 4
      %s15 = int_to_ptr.vmem [resolvable:$true] %s14
      %17 = dma.hbm_to_vmem [thread:$0]  %s0, 256, %s15, [#allocation3]
    $region5: #{tpu_custom_call.1} parent=1 // pred_fallthru
      _
    // Predicated region
    $region6: #{tpu_custom_call.1} parent=1 // pred_check
      _
    $region7: #{tpu_custom_call.1} parent=1 // pred_check_branch
      %19 = sbr.rel (0) target = $region9
    $region8: #{tpu_custom_call.1} parent=1 // pred_region
      %20 = dma.done [#allocation3], 256
    $region9: #{tpu_custom_call.1} parent=1 // pred_fallthru
      _
    %v21 = vld [vmem:[#allocation2] sm:$0xff]
    %v22 = vld [vmem:[#allocation2 + $0x8] sm:$0xff]
    %23 = vst [vmem:[#allocation5] sm:$0xff] %v21
    %24 = vst [vmem:[#allocation5 + $0x8] sm:$0xff] %v22
    // Predicated region
    $region10: #{tpu_custom_call.1} parent=1 // pred_check
      _
    $region11: #{tpu_custom_call.1} parent=1 // pred_check_branch
      %26 = sbr.rel (0) target = $region13
    $region12: #{tpu_custom_call.1} parent=1 // pred_region
      %s28 = ssub.s32 256, 256
      %29 = vsyncadd [#allocation4], %s28
      %s31 = sshll.u32 [#allocation5], 4
      %s32 = int_to_ptr.vmem [resolvable:$true] %s31
      %34 = dma.vmem_to_hbm [thread:$0]  %s32, 256, %s1, [#allocation4]
    $region13: #{tpu_custom_call.1} parent=1 // pred_fallthru
      _
    // Predicated region
    $region14: #{tpu_custom_call.1} parent=1 // pred_check
      _
    $region15: #{tpu_custom_call.1} parent=1 // pred_check_branch
      %36 = sbr.rel (0) target = $region17
    $region16: #{tpu_custom_call.1} parent=1 // pred_region
      %37 = dma.done [#allocation4], 256
    $region17: #{tpu_custom_call.1} parent=1 // pred_fallthru
      _
    %38 = vsyncpa [#allocation3], 1
    %39 = vsyncpa [#allocation4], 1

</llo_original>
